<compile_context>
chip_gen: v7x
topology: tpu7x:2x2x1
jax: 0.10.0
libtpu: 0.0.40
codegen_flags: <defaults>
</compile_context>

<pallas_src>
import numpy as np
import jax
import jax.numpy as jnp
from jax import lax
from jax.experimental import pallas as pl
from jax.experimental.pallas import tpu as pltpu


def _round_up(x, m):
    return ((x + m - 1) // m) * m


def _default_num_splits():
    """Use 2 reduction splits on v7x (2 TensorCores/chip), 1 elsewhere."""
    try:
        kind = jax.devices()[0].device_kind.lower()
    except Exception:
        return 1
    return 2 if ("v7" in kind or "7x" in kind) else 1


def _choose_tiles(C, N, gt_itemsize, pred_itemsize, requested=None):
    """Pick (tile_n, chunk): DMA tile width per grid step and inner chunk.

    tile_n is sized by bytes (actual input dtypes) so each grid step streams
    ~3 MiB of input, amortizing grid-step overhead against DMA, and is capped
    so double-buffered input blocks stay within a 24 MiB budget (v7x-safe).
    chunk bounds the in-kernel f32 temporaries of the elementwise chain.
    """
    c_pad = _round_up(max(C, 1), 8)
    stream_bytes_per_lane = c_pad * (gt_itemsize + pred_itemsize)
    if requested is not None:
        tile = _round_up(int(requested), 128)
    else:
        target = 3 * 1024 * 1024
        tile = max(128, (target // stream_bytes_per_lane) // 128 * 128)
    # Cap: 2 inputs x 2 pipeline buffers must fit the VMEM budget.
    budget = 24 * 1024 * 1024
    per_lane = 2 * stream_bytes_per_lane
    max_tile = max(128, (budget // per_lane) // 128 * 128)
    tile = min(tile, max_tile)
    tile = min(tile, _round_up(N, 128))     # don't overshoot small inputs
    tile = max(tile, 128)
    if tile >= 1024:
        tile = (tile // 1024) * 1024        # make chunk divide tile exactly
        chunk = 1024
    else:
        chunk = tile
    return tile, chunk


def _make_kernel(C, tile, chunk, n_total, per_split, needs_boundary, clip_gt):
    n_chunks = tile // chunk
    n_fold = chunk // 128

    def _chain(gt, pred):
        pred_pos = jnp.clip(pred.astype(jnp.float32), 0.0, 1.0)
        y_pos = gt.astype(jnp.float32)
        if clip_gt:
            y_pos = jnp.clip(y_pos, 0.0, 1.0)
        prod_tp = y_pos * pred_pos              # y_pos * pred_pos
        prod_fp = pred_pos - prod_tp            # (1 - y_pos) * pred_pos (exact)
        return prod_tp, prod_fp

    def _fold(prod):
        # (C, chunk) -> (C, 128): lane-aligned VALU adds, no cross-lane XLU.
        part = prod[:, 0:128]
        for j in range(1, n_fold):
            part = part + prod[:, j * 128:(j + 1) * 128]
        return part

    def kernel(gt_ref, pred_ref, tp_ref, fp_ref):
        k = pl.program_id(1)

        # Output blocks are resident across the reduction axis k (their index
        # map ignores k): zero once, accumulate directly, no scratch / copy.
        @pl.when(k == 0)
        def _init():
            tp_ref[...] = jnp.zeros_like(tp_ref)
            fp_ref[...] = jnp.zeros_like(fp_ref)

        def _accumulate(rem=None):
            if rem is not None:
                lane = lax.broadcasted_iota(jnp.int32, (C, chunk), 1)

            def body(i, carry):
                tp_p, fp_p = carry
                off = pl.multiple_of(i * chunk, chunk)
                gt = gt_ref[:, pl.ds(off, chunk)]
                pred = pred_ref[:, pl.ds(off, chunk)]
                prod_tp, prod_fp = _chain(gt, pred)
                if rem is not None:
                    valid = lane < (rem - off)
                    # Mask the *products* so OOB garbage (even NaN/Inf) in the
                    # padded region cannot leak into the sums.
                    prod_tp = jnp.where(valid, prod_tp, 0.0)
                    prod_fp = jnp.where(valid, prod_fp, 0.0)
                return tp_p + _fold(prod_tp), fp_p + _fold(prod_fp)

            zero = jnp.zeros((C, 128), jnp.float32)
            tp_p, fp_p = lax.fori_loop(0, n_chunks, body, (zero, zero))
            tp_ref[0, :, :] += tp_p
            fp_ref[0, :, :] += fp_p

        if not needs_boundary:
            _accumulate()                       # mask-free hot path everywhere
        else:
            s = pl.program_id(0)
            tile_idx = s * per_split + k
            rem = n_total - tile_idx * tile     # valid lanes left in this tile

            @pl.when(rem >= tile)               # full tile: mask-free fast path
            def _full():
                _accumulate()

            @pl.when(jnp.logical_and(rem > 0, rem < tile))   # ragged tail tile
            def _tail():
                _accumulate(rem=rem)
            # rem <= 0: clamped dummy tile (split padding) -> contributes 0.

    return kernel


def precision(y_ground_truth, y_prediction, ignore_index=None,
              tile_n=None, num_splits=None, assume_binary_gt=None):
    """Pallas equivalent of Precision.forward for 2-D (C, N) masks.

    Dtype contract (HBM traffic is the first-order cost on v5e/v6e): pass
    ground truth as a narrow dtype and predictions as bf16 where possible —
    the f32 cast happens in-kernel under the DMA.  Set assume_binary_gt=True
    (automatic for bool gt) to skip the clip on ground truth.
    """
    assert y_ground_truth.shape == y_prediction.shape
    assert y_ground_truth.ndim == 2, "expected (C, N) inputs"
    C, N = y_prediction.shape

    gt_isz = jnp.dtype(y_ground_truth.dtype).itemsize
    pred_isz = jnp.dtype(y_prediction.dtype).itemsize
    if assume_binary_gt is None:
        assume_binary_gt = jnp.issubdtype(y_ground_truth.dtype, jnp.bool_)
    clip_gt = not assume_binary_gt

    tile, chunk = _choose_tiles(C, N, gt_isz, pred_isz, tile_n)

    T = -(-N // tile)                       # number of lane-tiles
    auto_splits = num_splits is None
    if auto_splits:
        num_splits = _default_num_splits()
    S = max(1, min(int(num_splits), T))
    if auto_splits and T < 4:
        S = 1                               # too few tiles to be worth splitting
    # Keep at most one clamped dummy tile so the split DMA stays balanced.
    while S > 1 and S * (-(-T // S)) - T > 1:
        S -= 1
    per_split = -(-T // S)
    padded_T = S * per_split
    needs_clamp = padded_T != T             # last split ends in dummy tile(s)
    needs_boundary = padded_T * tile != N   # some tile is not fully valid
    # Dummy tiles must imply the boundary (masking/skip) kernel variant.
    assert needs_boundary or not needs_clamp

    if needs_clamp:
        def in_index(s, k):
            return (0, jnp.minimum(s * per_split + k, T - 1))
    else:
        def in_index(s, k):
            return (0, s * per_split + k)

    kernel = _make_kernel(C, tile, chunk, N, per_split, needs_boundary, clip_gt)

    # VMEM accounting: double-buffered input blocks (at their native dtypes),
    # double-buffered (1, C, 128) f32 output blocks, and the in-kernel f32
    # elementwise temporaries (bounded by `chunk`, not the DMA tile).
    c_pad = _round_up(max(C, 1), 8)
    working = (2 * c_pad * tile * (gt_isz + pred_isz)
               + 2 * 2 * c_pad * 128 * 4
               + 8 * c_pad * chunk * 4)
    vmem_limit = int(min(56 * 1024 * 1024, max(32 * 1024 * 1024, 2 * working)))

    tp_parts, fp_parts = pl.pallas_call(
        kernel,
        out_shape=(
            jax.ShapeDtypeStruct((S, C, 128), jnp.float32),
            jax.ShapeDtypeStruct((S, C, 128), jnp.float32),
        ),
        grid_spec=pltpu.PrefetchScalarGridSpec(
            num_scalar_prefetch=0,
            grid=(S, per_split),
            in_specs=[
                pl.BlockSpec((C, tile), in_index),
                pl.BlockSpec((C, tile), in_index),
            ],
            out_specs=[
                pl.BlockSpec((1, C, 128), lambda s, k: (s, 0, 0)),
                pl.BlockSpec((1, C, 128), lambda s, k: (s, 0, 0)),
            ],
        ),
        compiler_params=pltpu.CompilerParams(
            dimension_semantics=("parallel", "arbitrary"),
            vmem_limit_bytes=vmem_limit,
        ),
    )(y_ground_truth, y_prediction)

    # O(C) finalize as cheap JAX glue (no jnp.take / jnp.pad copies of the
    # full (C, N) inputs on the hot path).
    tp = jnp.sum(tp_parts, axis=(0, 2))     # (C,)
    fp = jnp.sum(fp_parts, axis=(0, 2))     # (C,)
    smooth = 1.0
    prec = (tp + smooth) / (tp + fp + smooth)
    if ignore_index is not None:
        keep = np.arange(C)[np.arange(C) != ignore_index]
        prec = prec[keep]
    return jnp.mean(prec)


def _reference(y_gt, y_pred, ignore_index=None):
    """Pure-JAX reference mirroring the PyTorch forward."""
    C = y_pred.shape[0]
    if ignore_index is not None:
        keep = np.arange(C)[np.arange(C) != ignore_index]
        y_gt = y_gt[keep]
        y_pred = y_pred[keep]
    y_gt = y_gt.astype(jnp.float32)
    y_pred = y_pred.astype(jnp.float32)
    smooth = 1.0
    pred_pos = jnp.clip(y_pred, 0, 1)
    y_pos = jnp.clip(y_gt, 0, 1)
    y_neg = 1 - y_pos
    tp = jnp.sum(y_pos * pred_pos, axis=1)
    fp = jnp.sum(y_neg * pred_pos, axis=1)
    return jnp.mean((tp + smooth) / (tp + fp + smooth))


if __name__ == "__main__":
    key = jax.random.PRNGKey(0)
    k1, k2, k3, k4, k5, k6 = jax.random.split(key, 6)

    # Main case: (C, N) = (4, 16*16) — channels x flattened spatial mask.
    C, H, W = 4, 16, 16
    N = H * W
    y_gt = (jax.random.uniform(k1, (C, N)) > 0.5).astype(jnp.float32)
    y_pred = jax.random.uniform(k2, (C, N), dtype=jnp.float32)

    res = jax.block_until_ready(precision(y_gt, y_pred, ignore_index=2))
    ref = _reference(y_gt, y_pred, ignore_index=2)
    assert jnp.allclose(res, ref, rtol=1e-5, atol=1e-5), (res, ref)

    res0 = jax.block_until_ready(precision(y_gt, y_pred, ignore_index=None))
    ref0 = _reference(y_gt, y_pred, ignore_index=None)
    assert jnp.allclose(res0, ref0, rtol=1e-5, atol=1e-5), (res0, ref0)

    # Ragged N (not a multiple of 128): in-kernel tail mask, no host padding.
    N2 = 200
    y_gt2 = (jax.random.uniform(k3, (C, N2)) > 0.5).astype(jnp.float32)
    y_pred2 = jax.random.uniform(k4, (C, N2), dtype=jnp.float32)
    res2 = jax.block_until_ready(precision(y_gt2, y_pred2, ignore_index=1))
    ref2 = _reference(y_gt2, y_pred2, ignore_index=1)
    assert jnp.allclose(res2, ref2, rtol=1e-5, atol=1e-5), (res2, ref2)

    # Multi-tile + forced 2-way reduction split (v7x two-TensorCore path) with
    # a narrow prediction dtype; exercises clamped dummy-tile + tail-mask path.
    N3 = 700
    y_gt3 = (jax.random.uniform(k3, (C, N3)) > 0.5).astype(jnp.float32)
    y_pred3 = jax.random.uniform(k4, (C, N3)).astype(jnp.bfloat16)
    res3 = jax.block_until_ready(
        precision(y_gt3, y_pred3, ignore_index=0, tile_n=256, num_splits=2))
    ref3 = _reference(y_gt3, y_pred3, ignore_index=0)
    assert jnp.allclose(res3, ref3, rtol=1e-3, atol=1e-3), (res3, ref3)

    # Full 8-sublane channels + binary-gt specialization (clip on gt skipped),
    # multi-chunk mask-free fast path, bf16 pred kept narrow in HBM.
    C4, N4 = 8, 8192
    y_gt4 = (jax.random.uniform(k5, (C4, N4)) > 0.5).astype(jnp.float32)
    y_pred4 = jax.random.uniform(k6, (C4, N4)).astype(jnp.bfloat16)
    res4 = jax.block_until_ready(
        precision(y_gt4, y_pred4, ignore_index=5, assume_binary_gt=True))
    ref4 = _reference(y_gt4, y_pred4, ignore_index=5)
    assert jnp.allclose(res4, ref4, rtol=1e-3, atol=1e-3), (res4, ref4)

    # Larger N with the default bytes-based tile: multiple tiles, resident
    # output-block accumulation across the reduction axis, ragged tail.
    C5, N5 = 4, 100000
    y_gt5 = (jax.random.uniform(k1, (C5, N5)) > 0.5).astype(jnp.float32)
    y_pred5 = jax.random.uniform(k2, (C5, N5), dtype=jnp.float32)
    res5 = jax.block_until_ready(precision(y_gt5, y_pred5, ignore_index=3))
    ref5 = _reference(y_gt5, y_pred5, ignore_index=3)
    assert jnp.allclose(res5, ref5, rtol=1e-4, atol=1e-4), (res5, ref5)

    print("KERNEL_OK")
</pallas_src>

<mosaic_0001>
module attributes {stable_mosaic.version = 11 : i64} {
  func.func @kernel(%arg0: i32, %arg1: i32, %arg2: memref<4x256xf32, #tpu.memory_space<vmem>>, %arg3: memref<4x256xf32, #tpu.memory_space<vmem>>, %arg4: memref<1x4x128xf32, #tpu.memory_space<vmem>>, %arg5: memref<1x4x128xf32, #tpu.memory_space<vmem>>) attributes {dimension_semantics = [#tpu.dimension_semantics<parallel>, #tpu.dimension_semantics<arbitrary>], iteration_bounds = array<i64: 1, 1>, scalar_prefetch = 0 : i64, scratch_operands = 0 : i64, tpu.core_type = #tpu.core_type<tc>, window_params = [{transform_indices = @transform_0, window_bounds = array<i64: 4, 256>}, {transform_indices = @transform_1, window_bounds = array<i64: 4, 256>}, {transform_indices = @transform_2, window_bounds = array<i64: 1, 4, 128>}, {transform_indices = @transform_3, window_bounds = array<i64: 1, 4, 128>}]} {
    %c0_i32 = arith.constant 0 : i32
    %0 = arith.cmpi eq, %arg1, %c0_i32 : i32
    %1 = arith.extui %0 : i1 to i32
    %c0_i32_0 = arith.constant 0 : i32
    %2 = arith.cmpi ne, %1, %c0_i32_0 : i32
    scf.if %2 {
      %cst_19 = arith.constant 0.000000e+00 : f32
      %40 = vector.broadcast %cst_19 : f32 to vector<1x4x128xf32>
      %c0_20 = arith.constant 0 : index
      %c0_21 = arith.constant 0 : index
      %c0_22 = arith.constant 0 : index
      %41 = vector.load %arg4[%c0_20, %c0_21, %c0_22] : memref<1x4x128xf32, #tpu.memory_space<vmem>>, vector<1x4x128xf32>
      tpu.vector_store %arg4[%c0_20, %c0_21, %c0_22], %40 {strides = array<i32>} : memref<1x4x128xf32, #tpu.memory_space<vmem>>, vector<1x4x128xf32>,
      %cst_23 = arith.constant 0.000000e+00 : f32
      %42 = vector.broadcast %cst_23 : f32 to vector<1x4x128xf32>
      %c0_24 = arith.constant 0 : index
      %c0_25 = arith.constant 0 : index
      %c0_26 = arith.constant 0 : index
      %43 = vector.load %arg5[%c0_24, %c0_25, %c0_26] : memref<1x4x128xf32, #tpu.memory_space<vmem>>, vector<1x4x128xf32>
      tpu.vector_store %arg5[%c0_24, %c0_25, %c0_26], %42 {strides = array<i32>} : memref<1x4x128xf32, #tpu.memory_space<vmem>>, vector<1x4x128xf32>,
    } else {
    }
    %cst = arith.constant 0.000000e+00 : f32
    %3 = vector.broadcast %cst : f32 to vector<4x128xf32>
    %c0_i32_1 = arith.constant 0 : i32
    %c256_i32 = arith.constant 256 : i32
    %4 = arith.muli %c0_i32_1, %c256_i32 : i32
    %5 = tpu.assume_multiple %4, 256 : i32
    %c0 = arith.constant 0 : index
    %6 = arith.index_cast %5 : i32 to index
    %7 = vector.load %arg2[%c0, %6] : memref<4x256xf32, #tpu.memory_space<vmem>>, vector<4x256xf32>
    %c0_2 = arith.constant 0 : index
    %8 = arith.index_cast %5 : i32 to index
    %9 = vector.load %arg3[%c0_2, %8] : memref<4x256xf32, #tpu.memory_space<vmem>>, vector<4x256xf32>
    %cst_3 = arith.constant 0.000000e+00 : f32
    %cst_4 = arith.constant 1.000000e+00 : f32
    %10 = vector.broadcast %cst_3 : f32 to vector<4x256xf32>
    %11 = arith.maximumf %10, %9 : vector<4x256xf32>
    %12 = vector.broadcast %cst_4 : f32 to vector<4x256xf32>
    %13 = arith.minimumf %12, %11 : vector<4x256xf32>
    %cst_5 = arith.constant 0.000000e+00 : f32
    %cst_6 = arith.constant 1.000000e+00 : f32
    %14 = vector.broadcast %cst_5 : f32 to vector<4x256xf32>
    %15 = arith.maximumf %14, %7 : vector<4x256xf32>
    %16 = vector.broadcast %cst_6 : f32 to vector<4x256xf32>
    %17 = arith.minimumf %16, %15 : vector<4x256xf32>
    %18 = arith.mulf %17, %13 : vector<4x256xf32>
    %19 = arith.subf %13, %18 : vector<4x256xf32>
    %20 = vector.extract_strided_slice %18 {offsets = [0, 0], sizes = [4, 128], strides = [1, 1]} : vector<4x256xf32> to vector<4x128xf32>
    %21 = vector.extract_strided_slice %18 {offsets = [0, 128], sizes = [4, 128], strides = [1, 1]} : vector<4x256xf32> to vector<4x128xf32>
    %22 = arith.addf %20, %21 : vector<4x128xf32>
    %23 = arith.addf %3, %22 : vector<4x128xf32>
    %24 = vector.extract_strided_slice %19 {offsets = [0, 0], sizes = [4, 128], strides = [1, 1]} : vector<4x256xf32> to vector<4x128xf32>
    %25 = vector.extract_strided_slice %19 {offsets = [0, 128], sizes = [4, 128], strides = [1, 1]} : vector<4x256xf32> to vector<4x128xf32>
    %26 = arith.addf %24, %25 : vector<4x128xf32>
    %27 = arith.addf %3, %26 : vector<4x128xf32>
    %c1_i32 = arith.constant 1 : i32
    %c0_7 = arith.constant 0 : index
    %c0_8 = arith.constant 0 : index
    %c0_9 = arith.constant 0 : index
    %28 = vector.load %arg4[%c0_7, %c0_8, %c0_9] : memref<1x4x128xf32, #tpu.memory_space<vmem>>, vector<1x4x128xf32>
    %29 = vector.shape_cast %28 : vector<1x4x128xf32> to vector<4x128xf32>
    %30 = arith.addf %29, %23 : vector<4x128xf32>
    %c0_10 = arith.constant 0 : index
    %c0_11 = arith.constant 0 : index
    %c0_12 = arith.constant 0 : index
    %31 = vector.load %arg4[%c0_10, %c0_11, %c0_12] : memref<1x4x128xf32, #tpu.memory_space<vmem>>, vector<1x4x128xf32>
    %32 = vector.shape_cast %31 : vector<1x4x128xf32> to vector<4x128xf32>
    %33 = vector.shape_cast %30 : vector<4x128xf32> to vector<1x4x128xf32>
    tpu.vector_store %arg4[%c0_10, %c0_11, %c0_12], %33 {strides = array<i32>} : memref<1x4x128xf32, #tpu.memory_space<vmem>>, vector<1x4x128xf32>,
    %c0_13 = arith.constant 0 : index
    %c0_14 = arith.constant 0 : index
    %c0_15 = arith.constant 0 : index
    %34 = vector.load %arg5[%c0_13, %c0_14, %c0_15] : memref<1x4x128xf32, #tpu.memory_space<vmem>>, vector<1x4x128xf32>
    %35 = vector.shape_cast %34 : vector<1x4x128xf32> to vector<4x128xf32>
    %36 = arith.addf %35, %27 : vector<4x128xf32>
    %c0_16 = arith.constant 0 : index
    %c0_17 = arith.constant 0 : index
    %c0_18 = arith.constant 0 : index
    %37 = vector.load %arg5[%c0_16, %c0_17, %c0_18] : memref<1x4x128xf32, #tpu.memory_space<vmem>>, vector<1x4x128xf32>
    %38 = vector.shape_cast %37 : vector<1x4x128xf32> to vector<4x128xf32>
    %39 = vector.shape_cast %36 : vector<4x128xf32> to vector<1x4x128xf32>
    tpu.vector_store %arg5[%c0_16, %c0_17, %c0_18], %39 {strides = array<i32>} : memref<1x4x128xf32, #tpu.memory_space<vmem>>, vector<1x4x128xf32>,
    return
  }
  func.func @transform_0(%arg0: i32, %arg1: i32) -> (i32, i32) {
    %c1_i32 = arith.constant 1 : i32
    %0 = arith.muli %arg0, %c1_i32 : i32
    %1 = arith.addi %0, %arg1 : i32
    %c0_i32 = arith.constant 0 : i32
    %c0_i32_0 = arith.constant 0 : i32
    return %c0_i32, %1 : i32, i32
  }
  func.func @transform_1(%arg0: i32, %arg1: i32) -> (i32, i32) {
    %c1_i32 = arith.constant 1 : i32
    %0 = arith.muli %arg0, %c1_i32 : i32
    %1 = arith.addi %0, %arg1 : i32
    %c0_i32 = arith.constant 0 : i32
    %c0_i32_0 = arith.constant 0 : i32
    return %c0_i32, %1 : i32, i32
  }
  func.func @transform_2(%arg0: i32, %arg1: i32) -> (i32, i32, i32) {
    %c0_i32 = arith.constant 0 : i32
    %c0_i32_0 = arith.constant 0 : i32
    %c0_i32_1 = arith.constant 0 : i32
    return %arg0, %c0_i32, %c0_i32_0 : i32, i32, i32
  }
  func.func @transform_3(%arg0: i32, %arg1: i32) -> (i32, i32, i32) {
    %c0_i32 = arith.constant 0 : i32
    %c0_i32_0 = arith.constant 0 : i32
    %c0_i32_1 = arith.constant 0 : i32
    return %arg0, %c0_i32, %c0_i32_0 : i32, i32, i32
  }
}

</mosaic_0001>

<llo_original>
// kernel: tpu_custom_call.1
$region0: #{tpu_custom_call.1}
  #allocation0 [shape = 'u32[]', space=smem, size = 0x4, offset = 0x4, fixed_abs, tag = 'smem constant byte address 0x4 - core index']
  #allocation1 [shape = 'u32[144,128]{1,0:T(1,128)}', space=vmem, size = 0x12000, scoped, tag = 'internal scratch']
  %s0 = inlined_call_operand.hbm [shape: f32[4,256], index: 0, kind: input, shape index: {}]
  %s1 = inlined_call_operand.hbm [shape: f32[4,256], index: 1, kind: input, shape index: {}]
  %s2 = inlined_call_operand.hbm [shape: f32[1,4,128], index: 2, kind: output, shape index: {0}]
  %s3 = inlined_call_operand.hbm [shape: f32[1,4,128], index: 3, kind: output, shape index: {1}]
  %4 = xla_tuple %s2, %s3
  %s5 = sld [smem:[#allocation0]]
  $region38: #{tpu_custom_call.1} parent=0
    _
  %s7 = ssub.s32 1, %s5
  %s8 = scalar_select 0, %s7, %s5
  $region1: #{tpu_custom_call.1} parent=0
    #allocation2 [shape = 'u8[4096]{0}', space=vmem, size = 0x1000, scoped, tag = 'input window, operand 0, single buffered']
    #allocation3 [shape = 's32[1]{0}', space=sflag, size = 0x4, scoped, tag = 'scoped memory for tpu_custom_call.1']
    #allocation4 [shape = 's32[1]{0}', space=sflag, size = 0x4, scoped, tag = 'scoped memory for tpu_custom_call.1']
    #allocation5 [shape = 'u8[4096]{0}', space=vmem, size = 0x1000, scoped, tag = 'input window, operand 1, single buffered']
    #allocation6 [shape = 's32[1]{0}', space=sflag, size = 0x4, scoped, tag = 'scoped memory for tpu_custom_call.1']
    #allocation7 [shape = 'u8[2048]{0}', space=vmem, size = 0x800, scoped, tag = 'output window, operand 0, single buffered']
    #allocation8 [shape = 'u8[2048]{0}', space=vmem, size = 0x800, scoped, tag = 'output window, operand 1, single buffered']
    #allocation9 [shape = 's32[1]{0}', space=sflag, size = 0x4, scoped, tag = 'scoped memory for tpu_custom_call.1']
    %9 = vsyncpa [#allocation3], 0
    %10 = vsyncpa [#allocation6], 0
    %11 = vsyncpa [#allocation4], 0
    %12 = vsyncpa [#allocation9], 0
    // Predicated region
    $region2: #{tpu_custom_call.1} parent=1 // pred_check
      _
    $region3: #{tpu_custom_call.1} parent=1 // pred_check_branch
      %14 = sbr.rel (0) target = $region5
    $region4: #{tpu_custom_call.1} parent=1 // pred_region
      %s15 = sadd.s32 0, 0
      %s16 = smul.u32 2, %s15
      %s18 = ssub.s32 128, 128
      %19 = vsyncadd [#allocation3], %s18
      %s20 = smul.addr %s16, 64
      %s21 = scalar_lea.hbm %s0, %s20
      %s23 = sshll.u32 [#allocation2], 4
      %s24 = int_to_ptr.vmem [resolvable:$true] %s23
      %26 = dma.hbm_to_vmem [thread:$0]  %s21, 128, %s24, [#allocation3]
    $region5: #{tpu_custom_call.1} parent=1 // pred_fallthru
      _
    // Predicated region
    $region6: #{tpu_custom_call.1} parent=1 // pred_check
      _
    $region7: #{tpu_custom_call.1} parent=1 // pred_check_branch
      %28 = sbr.rel (0) target = $region9
    $region8: #{tpu_custom_call.1} parent=1 // pred_region
      %s29 = sadd.s32 0, 0
      %s30 = smul.u32 2, %s29
      %s32 = ssub.s32 128, 128
      %33 = vsyncadd [#allocation6], %s32
      %s34 = smul.addr %s30, 64
      %s35 = scalar_lea.hbm %s1, %s34
      %s37 = sshll.u32 [#allocation5], 4
      %s38 = int_to_ptr.vmem [resolvable:$true] %s37
      %40 = dma.hbm_to_vmem [thread:$0]  %s35, 128, %s38, [#allocation6]
    $region9: #{tpu_custom_call.1} parent=1 // pred_fallthru
      _
    // Predicated region
    $region10: #{tpu_custom_call.1} parent=1 // pred_check
      _
    $region11: #{tpu_custom_call.1} parent=1 // pred_check_branch
      %42 = sbr.rel (0) target = $region13
    $region12: #{tpu_custom_call.1} parent=1 // pred_region
      %43 = dma.done [#allocation3], 128
    $region13: #{tpu_custom_call.1} parent=1 // pred_fallthru
      _
    // Predicated region
    $region14: #{tpu_custom_call.1} parent=1 // pred_check
      _
    $region15: #{tpu_custom_call.1} parent=1 // pred_check_branch
      %45 = sbr.rel (0) target = $region17
    $region16: #{tpu_custom_call.1} parent=1 // pred_region
      %46 = dma.done [#allocation6], 128
    $region17: #{tpu_custom_call.1} parent=1 // pred_fallthru
      _
    %s47 = sadd.s32 0, 0
    %s48 = smul.u32 2, %s47
    %s49 = sadd.s32 0, 0
    %s50 = smul.u32 2, %s49
    %p51 = scmp.eq.s32.totalorder 0, 0
    // Predicated region
    $region18: #{tpu_custom_call.1} parent=1 // pred_check
      %p52 = pneg %p51
    $region19: #{tpu_custom_call.1} parent=1 // pred_check_branch
      %54 = sbr.rel (%p52) target = $region21
    $region20: #{tpu_custom_call.1} parent=1 // pred_region
      %55 = vst [vmem:[#allocation7] sm:$0xf] 0.0
      %56 = vst [vmem:[#allocation8] sm:$0xf] 0.0
    $region21: #{tpu_custom_call.1} parent=1 // pred_fallthru
      _
    %v57 = vld [vmem:[#allocation2] sm:$0xff]
    %v58 = vld [vmem:[#allocation5] sm:$0xff]
    %v59 = vmax.f32 %v58, 0.0
    %v60 = vmin.f32 %v59, 1.0
    %v61 = vmax.f32 %v57, 0.0
    %v62 = vmin.f32 %v61, 1.0
    %v63 = vmul.f32 %v62, %v60
    %v64 = vsub.f32 %v60, %v63
    %v66 = vrot.slane %v63, 4
    %v68 = vadd.f32 %v63, %v66
    %v69 = vadd.f32 %v68, 0.0
    %v71 = vrot.slane %v64, 4
    %v73 = vadd.f32 %v64, %v71
    %v74 = vadd.f32 %v73, 0.0
    %v75 = vld [vmem:[#allocation7] sm:$0xf]
    %v76 = vadd.f32 %v75, %v69
    %77 = vst [vmem:[#allocation7] sm:$0xf] %v76
    %v78 = vld [vmem:[#allocation8] sm:$0xf]
    %v79 = vadd.f32 %v78, %v74
    %80 = vst [vmem:[#allocation8] sm:$0xf] %v79
    // Predicated region
    $region22: #{tpu_custom_call.1} parent=1 // pred_check
      _
    $region23: #{tpu_custom_call.1} parent=1 // pred_check_branch
      %82 = sbr.rel (0) target = $region25
    $region24: #{tpu_custom_call.1} parent=1 // pred_region
      %s84 = ssub.s32 64, 64
      %85 = vsyncadd [#allocation4], %s84
      %s87 = sshll.u32 [#allocation7], 4
      %s88 = int_to_ptr.vmem [resolvable:$true] %s87
      %90 = dma.vmem_to_hbm [thread:$0]  %s88, 64, %s2, [#allocation4]
    $region25: #{tpu_custom_call.1} parent=1 // pred_fallthru
      _
    // Predicated region
    $region26: #{tpu_custom_call.1} parent=1 // pred_check
      _
    $region27: #{tpu_custom_call.1} parent=1 // pred_check_branch
      %92 = sbr.rel (0) target = $region29
    $region28: #{tpu_custom_call.1} parent=1 // pred_region
      %s94 = ssub.s32 64, 64
      %95 = vsyncadd [#allocation9], %s94
      %s97 = sshll.u32 [#allocation8], 4
      %s98 = int_to_ptr.vmem [resolvable:$true] %s97
      %100 = dma.vmem_to_hbm [thread:$0]  %s98, 64, %s3, [#allocation9]
    $region29: #{tpu_custom_call.1} parent=1 // pred_fallthru
      _
    // Predicated region
    $region30: #{tpu_custom_call.1} parent=1 // pred_check
      _
    $region31: #{tpu_custom_call.1} parent=1 // pred_check_branch
      %102 = sbr.rel (0) target = $region33
    $region32: #{tpu_custom_call.1} parent=1 // pred_region
      %103 = dma.done [#allocation4], 64
    $region33: #{tpu_custom_call.1} parent=1 // pred_fallthru
      _
    // Predicated region
    $region34: #{tpu_custom_call.1} parent=1 // pred_check
      _
    $region35: #{tpu_custom_call.1} parent=1 // pred_check_branch
      %105 = sbr.rel (0) target = $region37
    $region36: #{tpu_custom_call.1} parent=1 // pred_region
      %106 = dma.done [#allocation9], 64
    $region37: #{tpu_custom_call.1} parent=1 // pred_fallthru
      _
    %107 = vsyncpa [#allocation3], 1
    %108 = vsyncpa [#allocation6], 1
    %109 = vsyncpa [#allocation4], 1
    %110 = vsyncpa [#allocation9], 1

</llo_original>
